<compile_context>
chip_gen: v7x
topology: tpu7x:2x2x1
jax: 0.10.0
libtpu: 0.0.40
codegen_flags: <defaults>
</compile_context>

<pallas_src>
import math
import functools

import jax
import jax.numpy as jnp
from jax.experimental import pallas as pl
from jax.experimental.pallas import tpu as pltpu

LN_EPS = 1e-5


def _han_kernel(q_ref, k_ref, wo_ref, bo_ref, wm_ref, bm_ref, ga_ref, be_ref,
                nq_ref, nk_ref, attn_ref, *, inv_sqrt_d, compute_dtype):
    """One grid step == `bt` batch elements.

    q_ref    : (bt, H)      query tile (feature-last, unit q_len dim dropped in wrapper)
    k_ref    : (bt, L, H)   key tile (the only key stream)
    nq_ref   : (bt, H)      new_query
    nk_ref   : (bt*L, H)    new_key (row-flattened; reshaped back in the wrapper)
    attn_ref : (bt, L)      attention weights
    """
    f32 = jnp.float32
    bt, seq_len, hidden = k_ref.shape

    q = q_ref[...].astype(f32)                           # (bt, H)
    k_raw = k_ref[...]                                   # (bt, L, H) -- single HBM read
    k3 = k_raw.astype(f32)

    # ---- scaled dot-product attention on VPU/XLU (no degenerate MXU passes) ----
    s = jnp.sum(q[:, None, :] * k3, axis=-1) * inv_sqrt_d          # (bt, L)
    s = s - jnp.max(s, axis=-1, keepdims=True)
    e = jnp.exp(s)
    attn = e / jnp.sum(e, axis=-1, keepdims=True)                  # exact softmax
    attn_ref[...] = attn.astype(attn_ref.dtype)

    # Context directly as (bt, H): broadcast-multiply + reduce over the L (sublane) axis.
    ctx = jnp.sum(attn[:, :, None] * k3, axis=1)                   # (bt, H)

    gamma = ga_ref[...].astype(f32)                                # (1, H)
    beta = be_ref[...].astype(f32)
    inv_h = 1.0 / hidden

    def relu_layernorm(y):
        # ReLU -> LayerNorm with fused statistics (one pass: E[y] and E[y^2]).
        y = jnp.maximum(y, 0.0)
        mu = jnp.sum(y, axis=-1, keepdims=True) * inv_h
        m2 = jnp.sum(y * y, axis=-1, keepdims=True) * inv_h
        var = m2 - mu * mu
        return (y - mu) * jax.lax.rsqrt(var + LN_EPS) * gamma + beta

    # Observer head: one (bt, H) @ (H, H) MXU matmul for the whole tile.
    nq_lin = jnp.dot(ctx.astype(compute_dtype), wo_ref[...].astype(compute_dtype),
                     preferred_element_type=f32) + bo_ref[...].astype(f32)
    nq_ref[...] = relu_layernorm(nq_lin).astype(nq_ref.dtype)

    # Matrix head (FLOP-dominant): one (bt*L, H) @ (H, H) MXU matmul for the whole tile.
    # The (bt, L, H) -> (bt*L, H) collapse is layout-preserving when L % 8 == 0.
    k2 = k_raw.reshape(bt * seq_len, hidden).astype(compute_dtype)
    nk_lin = jnp.dot(k2, wm_ref[...].astype(compute_dtype),
                     preferred_element_type=f32) + bm_ref[...].astype(f32)
    nk_ref[...] = relu_layernorm(nk_lin).astype(nk_ref.dtype)


def _vmem_limit_bytes():
    cap = 128 * 1024 * 1024
    try:
        info = pltpu.get_tpu_info()
        cap = int(getattr(info, "vmem_capacity_bytes", cap) or cap)
    except Exception:
        pass
    # ~3/4 of physical, capped: ~48 MiB on v7x (64 MiB per TC), ~96 MiB on v5e/v6e.
    return int(min((cap * 3) // 4, 100 * 1024 * 1024))


def _choose_batch_tile(batch, seq_len, hidden, itemsize, vmem_limit):
    """Batch elements per grid step.

    Targets ~1024 (row, H) work rows per step, bounded by roughly half the VMEM limit
    (key-in + new_key-out are double-buffered), and keeps >= 2 grid steps when the
    (8,128) block constraint allows so both v7x TensorCores get work.
    """
    target_rows = 1024
    per_row = 2 * 2 * hidden * itemsize            # key in + new_key out, double-buffered
    rows = max(8, min(target_rows, (vmem_limit // 2) // max(per_row, 1)))
    bt = max(1, rows // max(seq_len, 1))
    if bt < batch:
        # (8,128): with bt < batch the 2-D query/attn blocks need bt % 8 == 0.
        bt = max(8, (bt // 8) * 8)
    if bt >= batch:
        # Prefer >= 2 grid steps when possible (v7x megacore sharding of the batch axis).
        half = ((batch + 1) // 2 + 7) // 8 * 8
        if batch > 8 and half < batch:
            return half
        return batch
    return bt


def han_block(query, key, params, *, batch_tile=None, mxu_dtype=None):
    """query: (Bq, 1, H), key: (B, L, H). Mirrors HAN_block.forward (eval mode).

    batch_tile: batch elements per grid step (default: auto, ~1024 key rows per step).
    mxu_dtype:  optional dtype (e.g. jnp.bfloat16) for the Linear-head MXU operands and
                the (H, H) weights on v6e/v7x; accumulation stays f32. Default float32.
    """
    B, L, H = key.shape
    q2 = query[:B].reshape(B, H)                   # drop the unit q_len dim (free in XLA)

    w_obs, b_obs, w_mat, b_mat, gamma, beta = params
    cdt = jnp.dtype(mxu_dtype) if mxu_dtype is not None else jnp.float32
    if mxu_dtype is not None:
        w_obs = w_obs.astype(cdt)                  # halve weight DMA / VMEM on v6e/v7x
        w_mat = w_mat.astype(cdt)
    b_obs2 = b_obs.reshape(1, H)
    b_mat2 = b_mat.reshape(1, H)
    gamma2 = gamma.reshape(1, H)
    beta2 = beta.reshape(1, H)

    itemsize = jnp.dtype(key.dtype).itemsize
    vmem_limit = _vmem_limit_bytes()
    if batch_tile is not None:
        bt = max(1, min(int(batch_tile), B))
        if bt < B and bt % 8:
            bt = min(B, ((bt + 7) // 8) * 8)       # keep the (8,128) block constraint
    else:
        bt = _choose_batch_tile(B, L, H, itemsize, vmem_limit)
    grid = (pl.cdiv(B, bt),)

    kernel = functools.partial(_han_kernel, inv_sqrt_d=1.0 / math.sqrt(H),
                               compute_dtype=cdt)

    w_itemsize = jnp.dtype(cdt).itemsize
    cost = pl.CostEstimate(
        flops=2 * B * L * H * H + 2 * B * H * H + 4 * B * L * H,
        transcendentals=B * L + 2 * B * (L + 1),
        bytes_accessed=(2 * B * L * H + 2 * B * H) * itemsize
                       + B * L * 4 + 2 * H * H * w_itemsize + 4 * H * 4,
    )

    call = pl.pallas_call(
        kernel,
        out_shape=(
            jax.ShapeDtypeStruct((B, H), query.dtype),      # new_query (row-batched)
            jax.ShapeDtypeStruct((B * L, H), key.dtype),    # new_key   (row-flattened)
            jax.ShapeDtypeStruct((B, L), jnp.float32),      # attention weights
        ),
        grid_spec=pltpu.PrefetchScalarGridSpec(
            num_scalar_prefetch=0,
            grid=grid,
            in_specs=[
                pl.BlockSpec((bt, H), lambda b: (b, 0)),        # query
                pl.BlockSpec((bt, L, H), lambda b: (b, 0, 0)),  # key (single stream)
                # Constant index_map -> HBM->VMEM copy happens once across the grid.
                pl.BlockSpec((H, H), lambda b: (0, 0)),         # W_observer (in, out)
                pl.BlockSpec((1, H), lambda b: (0, 0)),         # b_observer
                pl.BlockSpec((H, H), lambda b: (0, 0)),         # W_matrix (in, out)
                pl.BlockSpec((1, H), lambda b: (0, 0)),         # b_matrix
                pl.BlockSpec((1, H), lambda b: (0, 0)),         # ln gamma
                pl.BlockSpec((1, H), lambda b: (0, 0)),         # ln beta
            ],
            out_specs=[
                pl.BlockSpec((bt, H), lambda b: (b, 0)),
                pl.BlockSpec((bt * L, H), lambda b: (b, 0)),
                pl.BlockSpec((bt, L), lambda b: (b, 0)),
            ],
        ),
        compiler_params=pltpu.CompilerParams(
            dimension_semantics=("parallel",),      # batch tiles shard across v7x cores
            vmem_limit_bytes=vmem_limit,
        ),
        cost_estimate=cost,
    )

    nq2, nk2, attn = call(q2, key, w_obs, b_obs2, w_mat, b_mat2, gamma2, beta2)
    return nq2.reshape(B, 1, H), nk2.reshape(B, L, H), attn.reshape(B, 1, L)


def init_params(key, hidden_dim):
    """Deterministic parameter init (PyTorch-Linear-style uniform bounds)."""
    k1, k2, k3, k4 = jax.random.split(key, 4)
    bound = 1.0 / math.sqrt(hidden_dim)
    # Stored as (in, out) so the kernel computes x @ W + b.
    w_obs = jax.random.uniform(k1, (hidden_dim, hidden_dim), jnp.float32, -bound, bound)
    b_obs = jax.random.uniform(k2, (hidden_dim,), jnp.float32, -bound, bound)
    w_mat = jax.random.uniform(k3, (hidden_dim, hidden_dim), jnp.float32, -bound, bound)
    b_mat = jax.random.uniform(k4, (hidden_dim,), jnp.float32, -bound, bound)
    gamma = jnp.ones((hidden_dim,), jnp.float32)
    beta = jnp.zeros((hidden_dim,), jnp.float32)
    return (w_obs, b_obs, w_mat, b_mat, gamma, beta)


def _reference(query, key, params):
    """Pure-JAX reference mirroring the PyTorch forward (eval mode)."""
    w_obs, b_obs, w_mat, b_mat, gamma, beta = params
    B, L, H = key.shape
    q = query[:B]
    score = jnp.einsum("bqh,bkh->bqk", q, key) / math.sqrt(H)
    attn = jax.nn.softmax(score, axis=-1)
    context = jnp.einsum("bqk,bkh->bqh", attn, key)

    def head(x, w, b):
        y = jax.nn.relu(x @ w + b)
        mu = jnp.mean(y, axis=-1, keepdims=True)
        var = jnp.mean((y - mu) ** 2, axis=-1, keepdims=True)
        return (y - mu) / jnp.sqrt(var + LN_EPS) * gamma + beta

    return head(context, w_obs, b_obs), head(key, w_mat, b_mat), attn


if __name__ == "__main__":
    B, L, H = 2, 8, 32
    root = jax.random.PRNGKey(0)
    kq, kk, kp = jax.random.split(root, 3)

    query = jax.random.normal(kq, (B, 1, H), jnp.float32)
    key = jax.random.normal(kk, (B, L, H), jnp.float32)
    params = init_params(kp, H)

    nq, nk, attn = jax.block_until_ready(han_block(query, key, params))

    # Sanity check against the pure-JAX reference (exact softmax; f32 MXU accumulate).
    rq, rk, rattn = _reference(query, key, params)
    assert nq.shape == (B, 1, H) and nk.shape == (B, L, H) and attn.shape == (B, 1, L)
    assert jnp.allclose(attn, rattn, atol=1e-4, rtol=1e-4), "attn mismatch"
    assert jnp.allclose(nq, rq, atol=1e-4, rtol=1e-4), "new_query mismatch"
    assert jnp.allclose(nk, rk, atol=1e-4, rtol=1e-4), "new_key mismatch"

    print("KERNEL_OK")
</pallas_src>

<mosaic_0001>
module attributes {stable_mosaic.version = 11 : i64} {
  func.func @_han_kernel(%arg0: i32, %arg1: memref<2x32xf32, #tpu.memory_space<vmem>>, %arg2: memref<2x8x32xf32, #tpu.memory_space<vmem>>, %arg3: memref<32x32xf32, #tpu.memory_space<vmem>>, %arg4: memref<1x32xf32, #tpu.memory_space<vmem>>, %arg5: memref<32x32xf32, #tpu.memory_space<vmem>>, %arg6: memref<1x32xf32, #tpu.memory_space<vmem>>, %arg7: memref<1x32xf32, #tpu.memory_space<vmem>>, %arg8: memref<1x32xf32, #tpu.memory_space<vmem>>, %arg9: memref<2x32xf32, #tpu.memory_space<vmem>>, %arg10: memref<16x32xf32, #tpu.memory_space<vmem>>, %arg11: memref<2x8xf32, #tpu.memory_space<vmem>>) attributes {dimension_semantics = [#tpu.dimension_semantics<parallel>], iteration_bounds = array<i64: 1>, scalar_prefetch = 0 : i64, scratch_operands = 0 : i64, tpu.core_type = #tpu.core_type<tc>, window_params = [{transform_indices = @transform_0, window_bounds = array<i64: 2, 32>}, {transform_indices = @transform_1, window_bounds = array<i64: 2, 8, 32>}, {pipeline_mode = #tpu.pipeline_mode<synchronous>, transform_indices = @transform_2, window_bounds = array<i64: 32, 32>}, {pipeline_mode = #tpu.pipeline_mode<synchronous>, transform_indices = @transform_3, window_bounds = array<i64: 1, 32>}, {pipeline_mode = #tpu.pipeline_mode<synchronous>, transform_indices = @transform_4, window_bounds = array<i64: 32, 32>}, {pipeline_mode = #tpu.pipeline_mode<synchronous>, transform_indices = @transform_5, window_bounds = array<i64: 1, 32>}, {pipeline_mode = #tpu.pipeline_mode<synchronous>, transform_indices = @transform_6, window_bounds = array<i64: 1, 32>}, {pipeline_mode = #tpu.pipeline_mode<synchronous>, transform_indices = @transform_7, window_bounds = array<i64: 1, 32>}, {transform_indices = @transform_8, window_bounds = array<i64: 2, 32>}, {transform_indices = @transform_9, window_bounds = array<i64: 16, 32>}, {transform_indices = @transform_10, window_bounds = array<i64: 2, 8>}]} {
    %c0 = arith.constant 0 : index
    %c0_0 = arith.constant 0 : index
    %0 = vector.load %arg1[%c0, %c0_0] : memref<2x32xf32, #tpu.memory_space<vmem>>, vector<2x32xf32>
    %c0_1 = arith.constant 0 : index
    %c0_2 = arith.constant 0 : index
    %c0_3 = arith.constant 0 : index
    %1 = vector.load %arg2[%c0_1, %c0_2, %c0_3] : memref<2x8x32xf32, #tpu.memory_space<vmem>>, vector<2x8x32xf32>
    %2 = vector.shape_cast %0 : vector<2x32xf32> to vector<2x1x32xf32>
    %3 = vector.broadcast %2 : vector<2x1x32xf32> to vector<2x8x32xf32>
    %4 = arith.mulf %3, %1 : vector<2x8x32xf32>
    %cst = arith.constant dense<0.000000e+00> : vector<2x8xf32>
    %5 = vector.multi_reduction <add>, %4, %cst [2] : vector<2x8x32xf32> to vector<2x8xf32>
    %cst_4 = arith.constant 0.176776692 : f32
    %6 = vector.broadcast %cst_4 : f32 to vector<2x8xf32>
    %7 = arith.mulf %5, %6 : vector<2x8xf32>
    %cst_5 = arith.constant dense<0xFF800000> : vector<2xf32>
    %8 = vector.multi_reduction <maximumf>, %7, %cst_5 [1] : vector<2x8xf32> to vector<2xf32>
    %9 = vector.shape_cast %8 : vector<2xf32> to vector<2x1xf32>
    %10 = vector.broadcast %9 : vector<2x1xf32> to vector<2x8xf32>
    %11 = arith.subf %7, %10 : vector<2x8xf32>
    %12 = math.exp %11 : vector<2x8xf32>
    %cst_6 = arith.constant dense<0.000000e+00> : vector<2xf32>
    %13 = vector.multi_reduction <add>, %12, %cst_6 [1] : vector<2x8xf32> to vector<2xf32>
    %14 = vector.shape_cast %13 : vector<2xf32> to vector<2x1xf32>
    %15 = vector.broadcast %14 : vector<2x1xf32> to vector<2x8xf32>
    %16 = arith.divf %12, %15 : vector<2x8xf32>
    %c0_7 = arith.constant 0 : index
    %c0_8 = arith.constant 0 : index
    %17 = vector.load %arg11[%c0_7, %c0_8] : memref<2x8xf32, #tpu.memory_space<vmem>>, vector<2x8xf32>
    tpu.vector_store %arg11[%c0_7, %c0_8], %16 {strides = array<i32>} : memref<2x8xf32, #tpu.memory_space<vmem>>, vector<2x8xf32>,
    %18 = vector.shape_cast %16 : vector<2x8xf32> to vector<2x8x1xf32>
    %19 = vector.broadcast %18 : vector<2x8x1xf32> to vector<2x8x32xf32>
    %20 = arith.mulf %19, %1 : vector<2x8x32xf32>
    %cst_9 = arith.constant dense<0.000000e+00> : vector<2x32xf32>
    %21 = vector.multi_reduction <add>, %20, %cst_9 [1] : vector<2x8x32xf32> to vector<2x32xf32>
    %c0_10 = arith.constant 0 : index
    %c0_11 = arith.constant 0 : index
    %22 = vector.load %arg7[%c0_10, %c0_11] : memref<1x32xf32, #tpu.memory_space<vmem>>, vector<1x32xf32>
    %c0_12 = arith.constant 0 : index
    %c0_13 = arith.constant 0 : index
    %23 = vector.load %arg8[%c0_12, %c0_13] : memref<1x32xf32, #tpu.memory_space<vmem>>, vector<1x32xf32>
    %c0_14 = arith.constant 0 : index
    %c0_15 = arith.constant 0 : index
    %24 = vector.load %arg3[%c0_14, %c0_15] : memref<32x32xf32, #tpu.memory_space<vmem>>, vector<32x32xf32>
    %cst_16 = arith.constant dense<0.000000e+00> : vector<2x32xf32>
    %25 = tpu.matmul %21, %24, %cst_16 {dimension_numbers = #tpu.dot_dimension_numbers<[1], [0], [0], [1], [0, 0, 1, 1], [], []>} : vector<2x32xf32>, vector<32x32xf32>, vector<2x32xf32> -> vector<2x32xf32>
    %c0_17 = arith.constant 0 : index
    %c0_18 = arith.constant 0 : index
    %26 = vector.load %arg4[%c0_17, %c0_18] : memref<1x32xf32, #tpu.memory_space<vmem>>, vector<1x32xf32>
    %27 = vector.broadcast %26 : vector<1x32xf32> to vector<2x32xf32>
    %28 = arith.addf %25, %27 : vector<2x32xf32>
    %cst_19 = arith.constant 0.000000e+00 : f32
    %29 = vector.broadcast %cst_19 : f32 to vector<2x32xf32>
    %30 = arith.maximumf %28, %29 : vector<2x32xf32>
    %cst_20 = arith.constant dense<0.000000e+00> : vector<2xf32>
    %31 = vector.multi_reduction <add>, %30, %cst_20 [1] : vector<2x32xf32> to vector<2xf32>
    %32 = vector.shape_cast %31 : vector<2xf32> to vector<2x1xf32>
    %cst_21 = arith.constant 3.125000e-02 : f32
    %33 = vector.broadcast %cst_21 : f32 to vector<2x1xf32>
    %34 = arith.mulf %32, %33 : vector<2x1xf32>
    %35 = arith.mulf %30, %30 : vector<2x32xf32>
    %cst_22 = arith.constant dense<0.000000e+00> : vector<2xf32>
    %36 = vector.multi_reduction <add>, %35, %cst_22 [1] : vector<2x32xf32> to vector<2xf32>
    %37 = vector.shape_cast %36 : vector<2xf32> to vector<2x1xf32>
    %cst_23 = arith.constant 3.125000e-02 : f32
    %38 = vector.broadcast %cst_23 : f32 to vector<2x1xf32>
    %39 = arith.mulf %37, %38 : vector<2x1xf32>
    %40 = arith.mulf %34, %34 : vector<2x1xf32>
    %41 = arith.subf %39, %40 : vector<2x1xf32>
    %42 = vector.broadcast %34 : vector<2x1xf32> to vector<2x32xf32>
    %43 = arith.subf %30, %42 : vector<2x32xf32>
    %cst_24 = arith.constant 9.99999974E-6 : f32
    %44 = vector.broadcast %cst_24 : f32 to vector<2x1xf32>
    %45 = arith.addf %41, %44 : vector<2x1xf32>
    %46 = math.rsqrt %45 : vector<2x1xf32>
    %47 = vector.broadcast %46 : vector<2x1xf32> to vector<2x32xf32>
    %48 = arith.mulf %43, %47 : vector<2x32xf32>
    %49 = vector.broadcast %22 : vector<1x32xf32> to vector<2x32xf32>
    %50 = arith.mulf %48, %49 : vector<2x32xf32>
    %51 = vector.broadcast %23 : vector<1x32xf32> to vector<2x32xf32>
    %52 = arith.addf %50, %51 : vector<2x32xf32>
    %c0_25 = arith.constant 0 : index
    %c0_26 = arith.constant 0 : index
    %53 = vector.load %arg9[%c0_25, %c0_26] : memref<2x32xf32, #tpu.memory_space<vmem>>, vector<2x32xf32>
    tpu.vector_store %arg9[%c0_25, %c0_26], %52 {strides = array<i32>} : memref<2x32xf32, #tpu.memory_space<vmem>>, vector<2x32xf32>,
    %54 = vector.shape_cast %1 : vector<2x8x32xf32> to vector<16x32xf32>
    %c0_27 = arith.constant 0 : index
    %c0_28 = arith.constant 0 : index
    %55 = vector.load %arg5[%c0_27, %c0_28] : memref<32x32xf32, #tpu.memory_space<vmem>>, vector<32x32xf32>
    %cst_29 = arith.constant dense<0.000000e+00> : vector<16x32xf32>
    %56 = tpu.matmul %54, %55, %cst_29 {dimension_numbers = #tpu.dot_dimension_numbers<[1], [0], [0], [1], [0, 0, 1, 1], [], []>} : vector<16x32xf32>, vector<32x32xf32>, vector<16x32xf32> -> vector<16x32xf32>
    %c0_30 = arith.constant 0 : index
    %c0_31 = arith.constant 0 : index
    %57 = vector.load %arg6[%c0_30, %c0_31] : memref<1x32xf32, #tpu.memory_space<vmem>>, vector<1x32xf32>
    %58 = vector.broadcast %57 : vector<1x32xf32> to vector<16x32xf32>
    %59 = arith.addf %56, %58 : vector<16x32xf32>
    %cst_32 = arith.constant 0.000000e+00 : f32
    %60 = vector.broadcast %cst_32 : f32 to vector<16x32xf32>
    %61 = arith.maximumf %59, %60 : vector<16x32xf32>
    %cst_33 = arith.constant dense<0.000000e+00> : vector<16xf32>
    %62 = vector.multi_reduction <add>, %61, %cst_33 [1] : vector<16x32xf32> to vector<16xf32>
    %63 = vector.shape_cast %62 : vector<16xf32> to vector<16x1xf32>
    %cst_34 = arith.constant 3.125000e-02 : f32
    %64 = vector.broadcast %cst_34 : f32 to vector<16x1xf32>
    %65 = arith.mulf %63, %64 : vector<16x1xf32>
    %66 = arith.mulf %61, %61 : vector<16x32xf32>
    %cst_35 = arith.constant dense<0.000000e+00> : vector<16xf32>
    %67 = vector.multi_reduction <add>, %66, %cst_35 [1] : vector<16x32xf32> to vector<16xf32>
    %68 = vector.shape_cast %67 : vector<16xf32> to vector<16x1xf32>
    %cst_36 = arith.constant 3.125000e-02 : f32
    %69 = vector.broadcast %cst_36 : f32 to vector<16x1xf32>
    %70 = arith.mulf %68, %69 : vector<16x1xf32>
    %71 = arith.mulf %65, %65 : vector<16x1xf32>
    %72 = arith.subf %70, %71 : vector<16x1xf32>
    %73 = vector.broadcast %65 : vector<16x1xf32> to vector<16x32xf32>
    %74 = arith.subf %61, %73 : vector<16x32xf32>
    %cst_37 = arith.constant 9.99999974E-6 : f32
    %75 = vector.broadcast %cst_37 : f32 to vector<16x1xf32>
    %76 = arith.addf %72, %75 : vector<16x1xf32>
    %77 = math.rsqrt %76 : vector<16x1xf32>
    %78 = vector.broadcast %77 : vector<16x1xf32> to vector<16x32xf32>
    %79 = arith.mulf %74, %78 : vector<16x32xf32>
    %80 = vector.broadcast %22 : vector<1x32xf32> to vector<16x32xf32>
    %81 = arith.mulf %79, %80 : vector<16x32xf32>
    %82 = vector.broadcast %23 : vector<1x32xf32> to vector<16x32xf32>
    %83 = arith.addf %81, %82 : vector<16x32xf32>
    %c0_38 = arith.constant 0 : index
    %c0_39 = arith.constant 0 : index
    %84 = vector.load %arg10[%c0_38, %c0_39] : memref<16x32xf32, #tpu.memory_space<vmem>>, vector<16x32xf32>
    tpu.vector_store %arg10[%c0_38, %c0_39], %83 {strides = array<i32>} : memref<16x32xf32, #tpu.memory_space<vmem>>, vector<16x32xf32>,
    return
  }
  func.func @transform_0(%arg0: i32) -> (i32, i32) {
    %c0_i32 = arith.constant 0 : i32
    %c0_i32_0 = arith.constant 0 : i32
    return %arg0, %c0_i32 : i32, i32
  }
  func.func @transform_1(%arg0: i32) -> (i32, i32, i32) {
    %c0_i32 = arith.constant 0 : i32
    %c0_i32_0 = arith.constant 0 : i32
    %c0_i32_1 = arith.constant 0 : i32
    return %arg0, %c0_i32, %c0_i32_0 : i32, i32, i32
  }
  func.func @transform_2(%arg0: i32) -> (i32, i32) {
    %c0_i32 = arith.constant 0 : i32
    %c0_i32_0 = arith.constant 0 : i32
    %c0_i32_1 = arith.constant 0 : i32
    return %c0_i32, %c0_i32_0 : i32, i32
  }
  func.func @transform_3(%arg0: i32) -> (i32, i32) {
    %c0_i32 = arith.constant 0 : i32
    %c0_i32_0 = arith.constant 0 : i32
    %c0_i32_1 = arith.constant 0 : i32
    return %c0_i32, %c0_i32_0 : i32, i32
  }
  func.func @transform_4(%arg0: i32) -> (i32, i32) {
    %c0_i32 = arith.constant 0 : i32
    %c0_i32_0 = arith.constant 0 : i32
    %c0_i32_1 = arith.constant 0 : i32
    return %c0_i32, %c0_i32_0 : i32, i32
  }
  func.func @transform_5(%arg0: i32) -> (i32, i32) {
    %c0_i32 = arith.constant 0 : i32
    %c0_i32_0 = arith.constant 0 : i32
    %c0_i32_1 = arith.constant 0 : i32
    return %c0_i32, %c0_i32_0 : i32, i32
  }
  func.func @transform_6(%arg0: i32) -> (i32, i32) {
    %c0_i32 = arith.constant 0 : i32
    %c0_i32_0 = arith.constant 0 : i32
    %c0_i32_1 = arith.constant 0 : i32
    return %c0_i32, %c0_i32_0 : i32, i32
  }
  func.func @transform_7(%arg0: i32) -> (i32, i32) {
    %c0_i32 = arith.constant 0 : i32
    %c0_i32_0 = arith.constant 0 : i32
    %c0_i32_1 = arith.constant 0 : i32
    return %c0_i32, %c0_i32_0 : i32, i32
  }
  func.func @transform_8(%arg0: i32) -> (i32, i32) {
    %c0_i32 = arith.constant 0 : i32
    %c0_i32_0 = arith.constant 0 : i32
    return %arg0, %c0_i32 : i32, i32
  }
  func.func @transform_9(%arg0: i32) -> (i32, i32) {
    %c0_i32 = arith.constant 0 : i32
    %c0_i32_0 = arith.constant 0 : i32
    return %arg0, %c0_i32 : i32, i32
  }
  func.func @transform_10(%arg0: i32) -> (i32, i32) {
    %c0_i32 = arith.constant 0 : i32
    %c0_i32_0 = arith.constant 0 : i32
    return %arg0, %c0_i32 : i32, i32
  }
}

</mosaic_0001>

<llo_original>
// kernel: tpu_custom_call.1
$region0: #{tpu_custom_call.1}
  #allocation0 [shape = 'u32[]', space=smem, size = 0x4, offset = 0x4, fixed_abs, tag = 'smem constant byte address 0x4 - core index']
  #allocation1 [shape = 'u32[144,128]{1,0:T(1,128)}', space=vmem, size = 0x12000, scoped, tag = 'internal scratch']
  %s0 = inlined_call_operand.hbm [shape: f32[2,32], index: 0, kind: input, shape index: {}]
  %s1 = inlined_call_operand.hbm [shape: f32[2,8,32], index: 1, kind: input, shape index: {}]
  %s2 = inlined_call_operand.hbm [shape: f32[32,32], index: 2, kind: input, shape index: {}]
  %s3 = inlined_call_operand.hbm [shape: f32[1,32], index: 3, kind: input, shape index: {}]
  %s4 = inlined_call_operand.hbm [shape: f32[32,32], index: 4, kind: input, shape index: {}]
  %s5 = inlined_call_operand.hbm [shape: f32[1,32], index: 5, kind: input, shape index: {}]
  %s6 = inlined_call_operand.hbm [shape: f32[1,32], index: 6, kind: input, shape index: {}]
  %s7 = inlined_call_operand.hbm [shape: f32[1,32], index: 7, kind: input, shape index: {}]
  %s8 = inlined_call_operand.hbm [shape: f32[2,32], index: 8, kind: output, shape index: {0}]
  %s9 = inlined_call_operand.hbm [shape: f32[16,32], index: 9, kind: output, shape index: {1}]
  %s10 = inlined_call_operand.hbm [shape: f32[2,8], index: 10, kind: output, shape index: {2}]
  %11 = xla_tuple %s8, %s9, %s10
  %s12 = sld [smem:[#allocation0]]
  $region90: #{tpu_custom_call.1} parent=0
    _
  %s14 = ssub.s32 1, %s12
  %s15 = scalar_select 0, %s14, %s12
  $region1: #{tpu_custom_call.1} parent=0
    #allocation2 [shape = 'u8[1024]{0}', space=vmem, size = 0x400, scoped, tag = 'input window, operand 0, single buffered']
    #allocation3 [shape = 's32[1]{0}', space=sflag, size = 0x4, scoped, tag = 'scoped memory for tpu_custom_call.1']
    #allocation4 [shape = 's32[1]{0}', space=sflag, size = 0x4, scoped, tag = 'scoped memory for tpu_custom_call.1']
    #allocation5 [shape = 'u8[8192]{0}', space=vmem, size = 0x2000, scoped, tag = 'input window, operand 1, single buffered']
    #allocation6 [shape = 's32[1]{0}', space=sflag, size = 0x4, scoped, tag = 'scoped memory for tpu_custom_call.1']
    #allocation7 [shape = 'u8[16384]{0}', space=vmem, size = 0x4000, scoped, tag = 'input window, operand 2, single buffered']
    #allocation8 [shape = 'u8[512]{0}', space=vmem, size = 0x400, scoped, tag = 'input window, operand 3, single buffered']
    #allocation9 [shape = 's32[1]{0}', space=sflag, size = 0x4, scoped, tag = 'scoped memory for tpu_custom_call.1']
    #allocation10 [shape = 'u8[16384]{0}', space=vmem, size = 0x4000, scoped, tag = 'input window, operand 4, single buffered']
    #allocation11 [shape = 'u8[512]{0}', space=vmem, size = 0x400, scoped, tag = 'input window, operand 5, single buffered']
    #allocation12 [shape = 's32[1]{0}', space=sflag, size = 0x4, scoped, tag = 'scoped memory for tpu_custom_call.1']
    #allocation13 [shape = 'u8[512]{0}', space=vmem, size = 0x400, scoped, tag = 'input window, operand 6, single buffered']
    #allocation14 [shape = 'u8[512]{0}', space=vmem, size = 0x400, scoped, tag = 'input window, operand 7, single buffered']
    #allocation15 [shape = 's32[1]{0}', space=sflag, size = 0x4, scoped, tag = 'scoped memory for tpu_custom_call.1']
    #allocation16 [shape = 'u8[1024]{0}', space=vmem, size = 0x400, scoped, tag = 'output window, operand 0, single buffered']
    #allocation17 [shape = 'u8[8192]{0}', space=vmem, size = 0x2000, scoped, tag = 'output window, operand 1, single buffered']
    #allocation18 [shape = 's32[1]{0}', space=sflag, size = 0x4, scoped, tag = 'scoped memory for tpu_custom_call.1']
    #allocation19 [shape = 'u8[1024]{0}', space=vmem, size = 0x400, scoped, tag = 'output window, operand 2, single buffered']
    %16 = vsyncpa [#allocation3], 0
    %17 = vsyncpa [#allocation6], 0
    %18 = vsyncpa [#allocation9], 0
    %19 = vsyncpa [#allocation12], 0
    %20 = vsyncpa [#allocation15], 0
    %21 = vsyncpa [#allocation4], 0
    %22 = vsyncpa [#allocation18], 0
    // Predicated region
    $region2: #{tpu_custom_call.1} parent=1 // pred_check
      _
    $region3: #{tpu_custom_call.1} parent=1 // pred_check_branch
      %24 = sbr.rel (0) target = $region5
    $region4: #{tpu_custom_call.1} parent=1 // pred_region
      %s26 = ssub.s32 32, 32
      %27 = vsyncadd [#allocation3], %s26
      %s29 = sshll.u32 [#allocation2], 4
      %s30 = int_to_ptr.vmem [resolvable:$true] %s29
      %32 = dma.hbm_to_vmem [thread:$0]  %s0, 32, %s30, [#allocation3]
    $region5: #{tpu_custom_call.1} parent=1 // pred_fallthru
      _
    // Predicated region
    $region6: #{tpu_custom_call.1} parent=1 // pred_check
      _
    $region7: #{tpu_custom_call.1} parent=1 // pred_check_branch
      %34 = sbr.rel (0) target = $region9
    $region8: #{tpu_custom_call.1} parent=1 // pred_region
      %s36 = ssub.s32 256, 256
      %37 = vsyncadd [#allocation6], %s36
      %s38 = sshll.u32 [#allocation5], 4
      %s39 = int_to_ptr.vmem [resolvable:$true] %s38
      %44 = dma.hbm_to_vmem [thread:$0]  %s1, 256, %s39, [#allocation6], 128, 128, 8
    $region9: #{tpu_custom_call.1} parent=1 // pred_fallthru
      _
    // Predicated region
    $region10: #{tpu_custom_call.1} parent=1 // pred_check
      _
    $region11: #{tpu_custom_call.1} parent=1 // pred_check_branch
      %46 = sbr.rel (0) target = $region13
    $region12: #{tpu_custom_call.1} parent=1 // pred_region
      %s48 = ssub.s32 512, 512
      %49 = vsyncadd [#allocation6], %s48
      %s50 = sshll.u32 [#allocation7], 4
      %s51 = int_to_ptr.vmem [resolvable:$true] %s50
      %56 = dma.hbm_to_vmem [thread:$0]  %s2, 512, %s51, [#allocation6], 128, 128, 8
    $region13: #{tpu_custom_call.1} parent=1 // pred_fallthru
      _
    // Predicated region
    $region14: #{tpu_custom_call.1} parent=1 // pred_check
      _
    $region15: #{tpu_custom_call.1} parent=1 // pred_check_branch
      %58 = sbr.rel (0) target = $region17
    $region16: #{tpu_custom_call.1} parent=1 // pred_region
      %s60 = ssub.s32 16, 16
      %61 = vsyncadd [#allocation9], %s60
      %s63 = sshll.u32 [#allocation8], 4
      %s64 = int_to_ptr.vmem [resolvable:$true] %s63
      %66 = dma.hbm_to_vmem [thread:$0]  %s3, 16, %s64, [#allocation9]
    $region17: #{tpu_custom_call.1} parent=1 // pred_fallthru
      _
    // Predicated region
    $region18: #{tpu_custom_call.1} parent=1 // pred_check
      _
    $region19: #{tpu_custom_call.1} parent=1 // pred_check_branch
      %68 = sbr.rel (0) target = $region21
    $region20: #{tpu_custom_call.1} parent=1 // pred_region
      %s70 = ssub.s32 512, 512
      %71 = vsyncadd [#allocation9], %s70
      %s72 = sshll.u32 [#allocation10], 4
      %s73 = int_to_ptr.vmem [resolvable:$true] %s72
      %78 = dma.hbm_to_vmem [thread:$0]  %s4, 512, %s73, [#allocation9], 128, 128, 8
    $region21: #{tpu_custom_call.1} parent=1 // pred_fallthru
      _
    // Predicated region
    $region22: #{tpu_custom_call.1} parent=1 // pred_check
      _
    $region23: #{tpu_custom_call.1} parent=1 // pred_check_branch
      %80 = sbr.rel (0) target = $region25
    $region24: #{tpu_custom_call.1} parent=1 // pred_region
      %s82 = ssub.s32 16, 16
      %83 = vsyncadd [#allocation12], %s82
      %s85 = sshll.u32 [#allocation11], 4
      %s86 = int_to_ptr.vmem [resolvable:$true] %s85
      %88 = dma.hbm_to_vmem [thread:$0]  %s5, 16, %s86, [#allocation12]
    $region25: #{tpu_custom_call.1} parent=1 // pred_fallthru
      _
    // Predicated region
    $region26: #{tpu_custom_call.1} parent=1 // pred_check
      _
    $region27: #{tpu_custom_call.1} parent=1 // pred_check_branch
      %90 = sbr.rel (0) target = $region29
    $region28: #{tpu_custom_call.1} parent=1 // pred_region
      %s92 = ssub.s32 16, 16
      %93 = vsyncadd [#allocation12], %s92
      %s95 = sshll.u32 [#allocation13], 4
      %s96 = int_to_ptr.vmem [resolvable:$true] %s95
      %98 = dma.hbm_to_vmem [thread:$0]  %s6, 16, %s96, [#allocation12]
    $region29: #{tpu_custom_call.1} parent=1 // pred_fallthru
      _
    // Predicated region
    $region30: #{tpu_custom_call.1} parent=1 // pred_check
      _
    $region31: #{tpu_custom_call.1} parent=1 // pred_check_branch
      %100 = sbr.rel (0) target = $region33
    $region32: #{tpu_custom_call.1} parent=1 // pred_region
      %s102 = ssub.s32 16, 16
      %103 = vsyncadd [#allocation15], %s102
      %s105 = sshll.u32 [#allocation14], 4
      %s106 = int_to_ptr.vmem [resolvable:$true] %s105
      %108 = dma.hbm_to_vmem [thread:$0]  %s7, 16, %s106, [#allocation15]
    $region33: #{tpu_custom_call.1} parent=1 // pred_fallthru
      _
    // Predicated region
    $region34: #{tpu_custom_call.1} parent=1 // pred_check
      _
    $region35: #{tpu_custom_call.1} parent=1 // pred_check_branch
      %110 = sbr.rel (0) target = $region37
    $region36: #{tpu_custom_call.1} parent=1 // pred_region
      %111 = dma.done [#allocation3], 32
    $region37: #{tpu_custom_call.1} parent=1 // pred_fallthru
      _
    // Predicated region
    $region38: #{tpu_custom_call.1} parent=1 // pred_check
      _
    $region39: #{tpu_custom_call.1} parent=1 // pred_check_branch
      %113 = sbr.rel (0) target = $region41
    $region40: #{tpu_custom_call.1} parent=1 // pred_region
      %114 = dma.done [#allocation6], 256
    $region41: #{tpu_custom_call.1} parent=1 // pred_fallthru
      _
    // Predicated region
    $region42: #{tpu_custom_call.1} parent=1 // pred_check
      _
    $region43: #{tpu_custom_call.1} parent=1 // pred_check_branch
      %116 = sbr.rel (0) target = $region45
    $region44: #{tpu_custom_call.1} parent=1 // pred_region
      %117 = dma.done [#allocation6], 512
    $region45: #{tpu_custom_call.1} parent=1 // pred_fallthru
      _
    // Predicated region
    $region46: #{tpu_custom_call.1} parent=1 // pred_check
      _
    $region47: #{tpu_custom_call.1} parent=1 // pred_check_branch
      %119 = sbr.rel (0) target = $region49
    $region48: #{tpu_custom_call.1} parent=1 // pred_region
      %120 = dma.done [#allocation9], 16
    $region49: #{tpu_custom_call.1} parent=1 // pred_fallthru
      _
    // Predicated region
    $region50: #{tpu_custom_call.1} parent=1 // pred_check
      _
    $region51: #{tpu_custom_call.1} parent=1 // pred_check_branch
      %122 = sbr.rel (0) target = $region53
    $region52: #{tpu_custom_call.1} parent=1 // pred_region
      %123 = dma.done [#allocation9], 512
    $region53: #{tpu_custom_call.1} parent=1 // pred_fallthru
      _
    // Predicated region
    $region54: #{tpu_custom_call.1} parent=1 // pred_check
      _
    $region55: #{tpu_custom_call.1} parent=1 // pred_check_branch
      %125 = sbr.rel (0) target = $region57
    $region56: #{tpu_custom_call.1} parent=1 // pred_region
      %126 = dma.done [#allocation12], 16
    $region57: #{tpu_custom_call.1} parent=1 // pred_fallthru
      _
    // Predicated region
    $region58: #{tpu_custom_call.1} parent=1 // pred_check
      _
    $region59: #{tpu_custom_call.1} parent=1 // pred_check_branch
      %128 = sbr.rel (0) target = $region61
    $region60: #{tpu_custom_call.1} parent=1 // pred_region
      %129 = dma.done [#allocation12], 16
    $region61: #{tpu_custom_call.1} parent=1 // pred_fallthru
      _
    // Predicated region
    $region62: #{tpu_custom_call.1} parent=1 // pred_check
      _
    $region63: #{tpu_custom_call.1} parent=1 // pred_check_branch
      %131 = sbr.rel (0) target = $region65
    $region64: #{tpu_custom_call.1} parent=1 // pred_region
      %132 = dma.done [#allocation15], 16
    $region65: #{tpu_custom_call.1} parent=1 // pred_fallthru
      _
    %v133 = vld [vmem:[#allocation2] sm:$0x3]
    %v134 = vld [vmem:[#allocation5] sm:$0xff]
    %v135 = vld [vmem:[#allocation5 + $0x8] sm:$0xff]
    %v138 = vunpack.c.l.s4 1966171168
    %v139 = vunpack.c.0.s8 %v138
    %v140 = vlaneseq
    %v141 = vshrl.u32 %v140, 7
    %v142 = vsub.s32 %v139, %v141
    %v143 = vrot.slane %v133, %v142
    %v144 = vcombine.high %v143, %v143
    %v146 = vunpack.c.l.s4 1966171168
    %v147 = vunpack.c.0.s8 %v146
    %v148 = vlaneseq
    %v149 = vshrl.u32 %v148, 7
    %v150 = vsub.s32 %v147, %v149
    %v151 = vrot.slane %v143, %v150
    %v153 = vunpack.c.l.s4 1966171168
    %v154 = vunpack.c.0.s8 %v153
    %v155 = vlaneseq
    %v156 = vshrl.u32 %v155, 7
    %v157 = vsub.s32 %v154, %v156
    %v158 = vrot.slane %v144, %v157
    %v159 = vlaneseq
    %v160 = vshrl.u32 %v159, 7
    %v161 = vsub.s32 0, %v160
    %v162 = vrot.slane %v151, %v161
    %v163 = vlaneseq
    %v164 = vshrl.u32 %v163, 7
    %v165 = vsub.s32 0, %v164
    %v166 = vrot.slane %v158, %v165
    %v169 = vmul.f32 %v162, %v134
    %v170 = vmul.f32 %v166, %v135
    %vm171 = vcmask 261120
    %v172 = vsel %vm171, %v169, 0.0
    %173 = vadd.xlane.f32.xlu0 %v172
    %v174 = vpop.xlane.xlu0 %173
    %v175 = vsel %vm171, %v170, 0.0
    %176 = vadd.xlane.f32.xlu0 %v175
    %v177 = vpop.xlane.xlu0 %176
    %v178 = vmul.f32 %v174, 0.17677669
    %v179 = vmul.f32 %v177, 0.17677669
    %v182 = vlaneseq
    %v183 = vand.u32 %v182, 127
    %v184 = vlaneseq
    %v185 = vshrl.u32 %v184, 7
    %v186 = vsub.s32 %v183, %v185
    %v187 = vrot.slane %v178, %v186
    %v188 = vlaneseq
    %v189 = vshrl.u32 %v188, 7
    %v190 = vsub.s32 %v183, %v189
    %v191 = vrot.slane %v179, %v190
    %vm192 = vcmask 1041409
    %v193 = vsel %vm192, %v191, %v187
    %vm195 = vcmask 58368
    %v196 = vsel %vm195, %v193, -inf
    %197 = vmax.xlane.f32.xlu0 %v196
    %v198 = vpop.xlane.xlu0 %197
    %v200 = vlaneseq
    %v201 = vshrl.u32 %v200, 7
    %v202 = vsub.s32 0, %v201
    %v203 = vrot.slane %v198, %v202
    %v204 = vlaneseq
    %v205 = vshrl.u32 %v204, 7
    %v206 = vsub.s32 1, %v205
    %v207 = vrot.slane %v198, %v206
    %v210 = vsub.f32 %v178, %v203
    %v211 = vsub.f32 %v179, %v207
    %v212 = vmul.f32 %v210, 1.442695
    %v213 = vpow.pop %v212
    %v214 = vmul.f32 %v211, 1.442695
    %v215 = vpow.pop %v214
    %218 = vset.pattern.permute.xlu0 0
    %219 = vperm.xlu0 %218, %v213
    %v220 = vpop.permute.xlu0 %219
    %221 = vset.pattern.permute.xlu0 0
    %222 = vperm.xlu0 %221, %v215
    %v223 = vpop.permute.xlu0 %222
    %v224 = vlaneseq
    %v225 = vshrl.u32 %v224, 7
    %v226 = vsub.s32 %v183, %v225
    %v227 = vrot.slane %v220, %v226
    %v228 = vlaneseq
    %v229 = vshrl.u32 %v228, 7
    %v230 = vsub.s32 %v183, %v229
    %v231 = vrot.slane %v223, %v230
    %v232 = vsel %vm192, %v231, %v227
    %v234 = vsel %vm195, %v232, 0.0
    %235 = vadd.xlane.f32.xlu0 %v234
    %v236 = vpop.xlane.xlu0 %235
    %v238 = vlaneseq
    %v239 = vshrl.u32 %v238, 7
    %v240 = vsub.s32 0, %v239
    %v241 = vrot.slane %v236, %v240
    %v242 = vlaneseq
    %v243 = vshrl.u32 %v242, 7
    %v244 = vsub.s32 1, %v243
    %v245 = vrot.slane %v236, %v244
    %v248 = vrcp.pop %v241
    %v249 = vmul.f32 %v213, %v248
    %v250 = vrcp.pop %v245
    %v251 = vmul.f32 %v215, %v250
    %254 = vset.pattern.permute.xlu0 0
    %255 = vperm.xlu0 %254, %v249
    %v256 = vpop.permute.xlu0 %255
    %257 = vset.pattern.permute.xlu0 0
    %258 = vperm.xlu0 %257, %v251
    %v259 = vpop.permute.xlu0 %258
    %v260 = vlaneseq
    %v261 = vshrl.u32 %v260, 7
    %v262 = vsub.s32 %v183, %v261
    %v263 = vrot.slane %v256, %v262
    %v264 = vlaneseq
    %v265 = vshrl.u32 %v264, 7
    %v266 = vsub.s32 %v183, %v265
    %v267 = vrot.slane %v259, %v266
    %v268 = vsel %vm192, %v267, %v263
    %270 = vst.msk [vmem:[#allocation19] sm:$0x3] %vm195, %v268
    %v273 = vmul.f32 %v256, %v134
    %v274 = vmul.f32 %v259, %v135
    %v275 = vsel %vm171, %v273, 0.0
    %v276 = vrot.slane %v275, 4
    %v277 = vadd.f32 %v275, %v276
    %v278 = vrot.slane %v277, 2
    %v279 = vadd.f32 %v277, %v278
    %v280 = vrot.slane %v279, 1
    %v281 = vadd.f32 %v279, %v280
    %v282 = vsel %vm171, %v274, 0.0
    %v283 = vrot.slane %v282, 4
    %v284 = vadd.f32 %v282, %v283
    %v285 = vrot.slane %v284, 2
    %v286 = vadd.f32 %v284, %v285
    %v287 = vrot.slane %v286, 1
    %v288 = vadd.f32 %v286, %v287
    %v289 = vld [vmem:[#allocation13] sm:$0x1]
    %v290 = vld [vmem:[#allocation14] sm:$0x1]
    %v291 = vld [vmem:[#allocation7] sm:$0xff]
    %v292 = vld [vmem:[#allocation7 + $0x8] sm:$0xff]
    %v293 = vld [vmem:[#allocation7 + $0x10] sm:$0xff]
    %v294 = vld [vmem:[#allocation7 + $0x18] sm:$0xff]
    %v295 = vld [vmem:[#allocation8] sm:$0x1]
    %v297 = vlaneseq
    %v298 = vshrl.u32 %v297, 7
    %v299 = vsub.s32 0, %v298
    %v300 = vrot.slane %v295, %v299
    %v304 = vsel %vm192, %v288, %v281
    %v305 = vsel %vm171, %v304, 0
    %307 = vmatprep.subr.mxu0 0.0
    %308 = vmatpush1.msra.mxu0 %v291
    %309 = vmatprep.subr.mxu0 0.0
    %310 = vmatpush1.msra.mxu0 %v292
    %311 = vmatprep.subr.mxu0 0.0
    %312 = vmatpush1.msra.mxu0 %v293
    %313 = vmatprep.subr.mxu0 0.0
    %314 = vmatpush1.msra.mxu0 %v294
    %315 = vmatprep.subr.mxu0 0.0
    %316 = vmatpush1.msra.mxu0 0.0
    %317 = vmatprep.subr.mxu0 0.0
    %318 = vmatpush1.msra.mxu0 0.0
    %319 = vmatprep.subr.mxu0 0.0
    %320 = vmatpush1.msra.mxu0 0.0
    %321 = vmatprep.subr.mxu0 0.0
    %322 = vmatpush1.msra.mxu0 0.0
    %323 = vmatprep.subr.mxu0 0.0
    %324 = vmatpush1.msra.mxu0 0.0
    %325 = vmatprep.subr.mxu0 0.0
    %326 = vmatpush1.msra.mxu0 0.0
    %327 = vmatprep.subr.mxu0 0.0
    %328 = vmatpush1.msra.mxu0 0.0
    %329 = vmatprep.subr.mxu0 0.0
    %330 = vmatpush1.msra.mxu0 0.0
    %331 = vmatprep.subr.mxu0 0.0
    %332 = vmatpush1.msra.mxu0 0.0
    %333 = vmatprep.subr.mxu0 0.0
    %334 = vmatpush1.msra.mxu0 0.0
    %335 = vmatprep.subr.mxu0 0.0
    %336 = vmatpush1.msra.mxu0 0.0
    %337 = vmatprep.subr.mxu0 0.0
    %338 = vmatpush1.msra.mxu0 0.0
    %339 = vmatprep.subr.mxu0 0.0
    %340 = vmatpush1.msra.mxu0 0.0
    %341 = vmatprep.subr.mxu0 0.0
    %342 = vmatpush1.msra.mxu0 0.0
    %343 = vmatprep.subr.mxu0 0.0
    %344 = vmatpush1.msra.mxu0 0.0
    %345 = vmatprep.subr.mxu0 0.0
    %346 = vmatpush1.msra.mxu0 0.0
    %347 = vmatprep.subr.mxu0 0.0
    %348 = vmatpush1.msra.mxu0 0.0
    %349 = vmatprep.subr.mxu0 0.0
    %350 = vmatpush1.msra.mxu0 0.0
    %351 = vmatprep.subr.mxu0 0.0
    %352 = vmatpush1.msra.mxu0 0.0
    %353 = vmatprep.subr.mxu0 0.0
    %354 = vmatpush1.msra.mxu0 0.0
    %355 = vmatprep.subr.mxu0 0.0
    %356 = vmatpush1.msra.mxu0 0.0
    %357 = vmatprep.subr.mxu0 0.0
    %358 = vmatpush1.msra.mxu0 0.0
    %359 = vmatprep.subr.mxu0 0.0
    %360 = vmatpush1.msra.mxu0 0.0
    %361 = vmatprep.subr.mxu0 0.0
    %362 = vmatpush1.msra.mxu0 0.0
    %363 = vmatprep.subr.mxu0 0.0
    %364 = vmatpush1.msra.mxu0 0.0
    %365 = vmatprep.subr.mxu0 0.0
    %366 = vmatpush1.msra.mxu0 0.0
    %367 = vmatprep.subr.mxu0 0.0
    %368 = vmatpush1.msra.mxu0 0.0
    %369 = vmatprep.subr.mxu0 0.0
    %370 = vmatpush1.msra.mxu0 0.0
    %371 = vmatprep.mubr.f32.mxu0 0.0
    %372 = vmatmul.mubr.f32.gmra.mrb[0].mxu0 %v305
    %v373 = vpop.f32.mrb[0].mxu0
    %v374 = vadd.f32 %v300, %v373
    %v375 = vpop.f32.mrb[0].mxu0
    %376 = vdwg.mxu0
    %v377 = vmax.f32 %v374, 0.0
    %vm378 = vcmask 254976
    %v379 = vsel %vm378, %v377, 0.0
    %380 = vadd.xlane.f32.xlu0 %v379
    %v381 = vpop.xlane.xlu0 %380
    %v382 = vmul.f32 %v381, 0.03125
    %v383 = vmul.f32 %v377, %v377
    %v384 = vsel %vm378, %v383, 0.0
    %385 = vadd.xlane.f32.xlu0 %v384
    %v386 = vpop.xlane.xlu0 %385
    %v387 = vmul.f32 %v386, 0.03125
    %v388 = vmul.f32 %v382, %v382
    %v389 = vsub.f32 %v387, %v388
    %v390 = vsub.f32 %v377, %v382
    %v391 = vadd.f32 %v389, 1e-05
    %v392 = vrsqrt.pop %v391
    %v393 = vmul.f32 %v390, %v392
    %v395 = vlaneseq
    %v396 = vshrl.u32 %v395, 7
    %v397 = vsub.s32 0, %v396
    %v398 = vrot.slane %v289, %v397
    %v400 = vmul.f32 %v393, %v398
    %v402 = vlaneseq
    %v403 = vshrl.u32 %v402, 7
    %v404 = vsub.s32 0, %v403
    %v405 = vrot.slane %v290, %v404
    %v407 = vadd.f32 %v400, %v405
    %408 = vst.msk [vmem:[#allocation16] sm:$0x3] %vm378, %v407
    %v409 = vld [vmem:[#allocation10] sm:$0xff]
    %v410 = vld [vmem:[#allocation10 + $0x8] sm:$0xff]
    %v411 = vld [vmem:[#allocation10 + $0x10] sm:$0xff]
    %v412 = vld [vmem:[#allocation10 + $0x18] sm:$0xff]
    %v413 = vld [vmem:[#allocation11] sm:$0x1]
    %v415 = vlaneseq
    %v416 = vshrl.u32 %v415, 7
    %v417 = vsub.s32 0, %v416
    %v418 = vrot.slane %v413, %v417
    %v421 = vsel %vm171, %v134, 0
    %v424 = vsel %vm171, %v135, 0
    %426 = vmatprep.subr.mxu0 0.0
    %427 = vmatpush1.msra.mxu0 %v409
    %428 = vmatprep.subr.mxu0 0.0
    %429 = vmatpush1.msra.mxu0 %v410
    %430 = vmatprep.subr.mxu0 0.0
    %431 = vmatpush1.msra.mxu0 %v411
    %432 = vmatprep.subr.mxu0 0.0
    %433 = vmatpush1.msra.mxu0 %v412
    %434 = vmatprep.subr.mxu0 0.0
    %435 = vmatpush1.msra.mxu0 0.0
    %436 = vmatprep.subr.mxu0 0.0
    %437 = vmatpush1.msra.mxu0 0.0
    %438 = vmatprep.subr.mxu0 0.0
    %439 = vmatpush1.msra.mxu0 0.0
    %440 = vmatprep.subr.mxu0 0.0
    %441 = vmatpush1.msra.mxu0 0.0
    %442 = vmatprep.subr.mxu0 0.0
    %443 = vmatpush1.msra.mxu0 0.0
    %444 = vmatprep.subr.mxu0 0.0
    %445 = vmatpush1.msra.mxu0 0.0
    %446 = vmatprep.subr.mxu0 0.0
    %447 = vmatpush1.msra.mxu0 0.0
    %448 = vmatprep.subr.mxu0 0.0
    %449 = vmatpush1.msra.mxu0 0.0
    %450 = vmatprep.subr.mxu0 0.0
    %451 = vmatpush1.msra.mxu0 0.0
    %452 = vmatprep.subr.mxu0 0.0
    %453 = vmatpush1.msra.mxu0 0.0
    %454 = vmatprep.subr.mxu0 0.0
    %455 = vmatpush1.msra.mxu0 0.0
    %456 = vmatprep.subr.mxu0 0.0
    %457 = vmatpush1.msra.mxu0 0.0
    %458 = vmatprep.subr.mxu0 0.0
    %459 = vmatpush1.msra.mxu0 0.0
    %460 = vmatprep.subr.mxu0 0.0
    %461 = vmatpush1.msra.mxu0 0.0
    %462 = vmatprep.subr.mxu0 0.0
    %463 = vmatpush1.msra.mxu0 0.0
    %464 = vmatprep.subr.mxu0 0.0
    %465 = vmatpush1.msra.mxu0 0.0
    %466 = vmatprep.subr.mxu0 0.0
    %467 = vmatpush1.msra.mxu0 0.0
    %468 = vmatprep.subr.mxu0 0.0
    %469 = vmatpush1.msra.mxu0 0.0
    %470 = vmatprep.subr.mxu0 0.0
    %471 = vmatpush1.msra.mxu0 0.0
    %472 = vmatprep.subr.mxu0 0.0
    %473 = vmatpush1.msra.mxu0 0.0
    %474 = vmatprep.subr.mxu0 0.0
    %475 = vmatpush1.msra.mxu0 0.0
    %476 = vmatprep.subr.mxu0 0.0
    %477 = vmatpush1.msra.mxu0 0.0
    %478 = vmatprep.subr.mxu0 0.0
    %479 = vmatpush1.msra.mxu0 0.0
    %480 = vmatprep.subr.mxu0 0.0
    %481 = vmatpush1.msra.mxu0 0.0
    %482 = vmatprep.subr.mxu0 0.0
    %483 = vmatpush1.msra.mxu0 0.0
    %484 = vmatprep.subr.mxu0 0.0
    %485 = vmatpush1.msra.mxu0 0.0
    %486 = vmatprep.subr.mxu0 0.0
    %487 = vmatpush1.msra.mxu0 0.0
    %488 = vmatprep.subr.mxu0 0.0
    %489 = vmatpush1.msra.mxu0 0.0
    %490 = vmatprep.mubr.f32.mxu0 0.0
    %491 = vmatmul.mubr.f32.gmra.mrb[0].mxu0 %v421
    %v492 = vpop.f32.mrb[0].mxu0
    %v493 = vadd.f32 %v418, %v492
    %v494 = vpop.f32.mrb[0].mxu0
    %495 = vmatprep.mubr.f32.mxu0 0.0
    %496 = vmatmul.mubr.f32.gmra.mrb[0].mxu0 %v424
    %v497 = vpop.f32.mrb[0].mxu0
    %v498 = vadd.f32 %v418, %v497
    %v499 = vpop.f32.mrb[0].mxu0
    %500 = vdwg.mxu0
    %v501 = vmax.f32 %v493, 0.0
    %v502 = vmax.f32 %v498, 0.0
    %v503 = vsel %vm171, %v501, 0.0
    %504 = vadd.xlane.f32.xlu0 %v503
    %v505 = vpop.xlane.xlu0 %504
    %v506 = vsel %vm171, %v502, 0.0
    %507 = vadd.xlane.f32.xlu0 %v506
    %v508 = vpop.xlane.xlu0 %507
    %v509 = vmul.f32 %v505, 0.03125
    %v510 = vmul.f32 %v508, 0.03125
    %v511 = vmul.f32 %v501, %v501
    %v512 = vmul.f32 %v502, %v502
    %v513 = vsel %vm171, %v511, 0.0
    %514 = vadd.xlane.f32.xlu0 %v513
    %v515 = vpop.xlane.xlu0 %514
    %v516 = vsel %vm171, %v512, 0.0
    %517 = vadd.xlane.f32.xlu0 %v516
    %v518 = vpop.xlane.xlu0 %517
    %v519 = vmul.f32 %v515, 0.03125
    %v520 = vmul.f32 %v518, 0.03125
    %v521 = vmul.f32 %v509, %v509
    %v522 = vmul.f32 %v510, %v510
    %v523 = vsub.f32 %v519, %v521
    %v524 = vsub.f32 %v520, %v522
    %v525 = vsub.f32 %v501, %v509
    %v526 = vsub.f32 %v502, %v510
    %v527 = vadd.f32 %v523, 1e-05
    %v528 = vadd.f32 %v524, 1e-05
    %v529 = vrsqrt.pop %v527
    %v530 = vrsqrt.pop %v528
    %v531 = vmul.f32 %v525, %v529
    %v532 = vmul.f32 %v526, %v530
    %v533 = vmul.f32 %v531, %v398
    %v534 = vmul.f32 %v532, %v398
    %v535 = vadd.f32 %v533, %v405
    %v536 = vadd.f32 %v534, %v405
    %537 = vst.msk [vmem:[#allocation17] sm:$0xff] %vm171, %v535
    %538 = vst.msk [vmem:[#allocation17 + $0x8] sm:$0xff] %vm171, %v536
    // Predicated region
    $region66: #{tpu_custom_call.1} parent=1 // pred_check
      _
    $region67: #{tpu_custom_call.1} parent=1 // pred_check_branch
      %540 = sbr.rel (0) target = $region69
    $region68: #{tpu_custom_call.1} parent=1 // pred_region
      %s542 = ssub.s32 32, 32
      %543 = vsyncadd [#allocation4], %s542
      %s545 = sshll.u32 [#allocation16], 4
      %s546 = int_to_ptr.vmem [resolvable:$true] %s545
      %548 = dma.vmem_to_hbm [thread:$0]  %s546, 32, %s8, [#allocation4]
    $region69: #{tpu_custom_call.1} parent=1 // pred_fallthru
      _
    // Predicated region
    $region70: #{tpu_custom_call.1} parent=1 // pred_check
      _
    $region71: #{tpu_custom_call.1} parent=1 // pred_check_branch
      %550 = sbr.rel (0) target = $region73
    $region72: #{tpu_custom_call.1} parent=1 // pred_region
      %s552 = ssub.s32 256, 256
      %553 = vsyncadd [#allocation18], %s552
      %s554 = sshll.u32 [#allocation17], 4
      %s555 = int_to_ptr.vmem [resolvable:$true] %s554
      %560 = dma.vmem_to_hbm [thread:$0]  %s555, 256, %s9, [#allocation18], 128, 128, 8
    $region73: #{tpu_custom_call.1} parent=1 // pred_fallthru
      _
    // Predicated region
    $region74: #{tpu_custom_call.1} parent=1 // pred_check
      _
    $region75: #{tpu_custom_call.1} parent=1 // pred_check_branch
      %562 = sbr.rel (0) target = $region77
    $region76: #{tpu_custom_call.1} parent=1 // pred_region
      %s564 = ssub.s32 32, 32
      %565 = vsyncadd [#allocation18], %s564
      %s567 = sshll.u32 [#allocation19], 4
      %s568 = int_to_ptr.vmem [resolvable:$true] %s567
      %570 = dma.vmem_to_hbm [thread:$0]  %s568, 32, %s10, [#allocation18]
    $region77: #{tpu_custom_call.1} parent=1 // pred_fallthru
      _
    // Predicated region
    $region78: #{tpu_custom_call.1} parent=1 // pred_check
      _
    $region79: #{tpu_custom_call.1} parent=1 // pred_check_branch
      %572 = sbr.rel (0) target = $region81
    $region80: #{tpu_custom_call.1} parent=1 // pred_region
      %573 = dma.done [#allocation4], 32
    $region81: #{tpu_custom_call.1} parent=1 // pred_fallthru
      _
    // Predicated region
    $region82: #{tpu_custom_call.1} parent=1 // pred_check
      _
    $region83: #{tpu_custom_call.1} parent=1 // pred_check_branch
      %575 = sbr.rel (0) target = $region85
    $region84: #{tpu_custom_call.1} parent=1 // pred_region
      %576 = dma.done [#allocation18], 256
    $region85: #{tpu_custom_call.1} parent=1 // pred_fallthru
      _
    // Predicated region
    $region86: #{tpu_custom_call.1} parent=1 // pred_check
      _
    $region87: #{tpu_custom_call.1} parent=1 // pred_check_branch
      %578 = sbr.rel (0) target = $region89
    $region88: #{tpu_custom_call.1} parent=1 // pred_region
      %579 = dma.done [#allocation18], 32
    $region89: #{tpu_custom_call.1} parent=1 // pred_fallthru
      _
    %580 = vsyncpa [#allocation3], 1
    %581 = vsyncpa [#allocation6], 1
    %582 = vsyncpa [#allocation9], 1
    %583 = vsyncpa [#allocation12], 1
    %584 = vsyncpa [#allocation15], 1
    %585 = vsyncpa [#allocation4], 1
    %586 = vsyncpa [#allocation18], 1

</llo_original>
